<compile_context>
chip_gen: v6e
topology: v6e:2x2x1
jax: 0.10.0
libtpu: 0.0.40
codegen_flags: <defaults>
</compile_context>

<pallas_src>
import functools

import jax
import jax.numpy as jnp
from jax import lax
from jax.experimental import pallas as pl
from jax.experimental.pallas import tpu as pltpu


_GOLDEN = 0x9E3779B9   # 2**32 / golden ratio
_MIX_A = 0x85EBCA6B    # murmur3 fmix32 constants
_MIX_B = 0xC2B2AE35


def _round_up(a, b):
    return (a + b - 1) // b * b


def _fmix32(h):
    """murmur3 32-bit finalizer (good avalanche). `h` is uint32."""
    h = h ^ (h >> 16)
    h = h * jnp.uint32(_MIX_A)
    h = h ^ (h >> 13)
    h = h * jnp.uint32(_MIX_B)
    h = h ^ (h >> 16)
    return h


def _forward_once(x_ref, w_ref, b_ref, seed, it, n_off, *, p, activation, n_total):
    """One MC forward pass on a (C_in, n_tile) tile -> (C_out, n_tile) f32."""
    c_in, n_tile = x_ref.shape
    c_out = w_ref.shape[0]

    # f32 compute path (inputs are f32 in this demo; for bf16 inputs on
    # v6e/v7x the mask-multiply could stay in bf16).
    x = x_ref[...].astype(jnp.float32)

    if p > 0.0:
        # Stateless counter-based PRNG: hash(global element index, seed, iter).
        rows = lax.broadcasted_iota(jnp.int32, (c_in, n_tile), 0)
        cols = lax.broadcasted_iota(jnp.int32, (c_in, n_tile), 1)
        g = (rows * n_total + cols + n_off).astype(jnp.uint32)
        key = _fmix32(seed.astype(jnp.uint32)
                      ^ (it.astype(jnp.uint32) * jnp.uint32(_GOLDEN)))
        h = _fmix32((g * jnp.uint32(_GOLDEN)) ^ key)
        # keep with prob (1 - p): u32 threshold compare + one select; the
        # inverted-dropout scale is folded into the select constant.
        threshold = jnp.uint32(min(int(round(p * float(2 ** 32))), 2 ** 32 - 1))
        scale = jnp.float32(1.0 / (1.0 - p))
        x = x * jnp.where(h >= threshold, scale, jnp.float32(0.0))

    # Tiny channel contraction (C_in -> C_out) on the VPU: C_in broadcast
    # FMAs over the lane-dense (C_out, n_tile) tile.  (MXU would see K=4, M=8.)
    w = w_ref[...].astype(jnp.float32)            # (C_out, C_in), tiny
    y = w[:, 0:1] * x[0:1, :]
    for c in range(1, c_in):                      # static, small
        y = y + w[:, c:c + 1] * x[c:c + 1, :]
    y = y + b_ref[...].astype(jnp.float32)        # (C_out, 1) lane broadcast

    if activation == "sigmoid":
        y = jax.nn.sigmoid(y)
    # activation is None -> identity (module default path)
    return y


def _mc_dropout_stack_kernel(seed_ref, x_ref, w_ref, b_ref, out_ref, *,
                             p, activation, n_tile, n_total):
    """Grid = (num_n_tiles, nb_iter); writes one (C_out, n_tile) slice/iter."""
    jn = pl.program_id(0)
    it = pl.program_id(1)
    y = _forward_once(x_ref, w_ref, b_ref, seed_ref[0], it, jn * n_tile,
                      p=p, activation=activation, n_total=n_total)
    out_ref[...] = y.astype(out_ref.dtype)


def _mc_dropout_stats_kernel(seed_ref, x_ref, w_ref, b_ref, mu_ref, std_ref, *,
                             p, activation, n_tile, n_total, nb_iter):
    """Fused mu/std: accumulate sum / sum-of-squares in the resident output
    blocks across the nb_iter grid axis; finalize on the last iteration."""
    jn = pl.program_id(0)
    it = pl.program_id(1)
    y = _forward_once(x_ref, w_ref, b_ref, seed_ref[0], it, jn * n_tile,
                      p=p, activation=activation, n_total=n_total)

    @pl.when(it == 0)
    def _init():
        mu_ref[...] = y
        std_ref[...] = y * y

    @pl.when(it > 0)
    def _accumulate():
        mu_ref[...] = mu_ref[...] + y
        std_ref[...] = std_ref[...] + y * y

    @pl.when(it == nb_iter - 1)
    def _finalize():
        s = mu_ref[...]
        ss = std_ref[...]
        mean = s * jnp.float32(1.0 / nb_iter)
        inv_ddof = 1.0 / max(nb_iter - 1, 1)          # torch.std uses ddof=1
        var = (ss - jnp.float32(nb_iter) * mean * mean) * jnp.float32(inv_ddof)
        mu_ref[...] = mean
        std_ref[...] = jnp.sqrt(jnp.maximum(var, 0.0))


def _prep_inputs(x_nchw, weight, bias):
    B, C_in, H, W = x_nchw.shape
    C_out = weight.shape[1]
    N = B * H * W
    # NCHW -> (C_in, N): the big fused spatial axis goes on lanes.
    x_cn = jnp.transpose(x_nchw.reshape(B, C_in, H * W), (1, 0, 2))
    x_cn = x_cn.reshape(C_in, N)
    w_t = jnp.transpose(weight)                       # (C_out, C_in)
    b_col = jnp.reshape(bias, (-1,)).reshape(C_out, 1)
    return x_cn, w_t, b_col, (B, C_in, H, W, C_out, N)


def _tiling(N, n_tile_max):
    n_tile = min(n_tile_max, _round_up(N, 128))       # lane-dense tiles
    n_pad = _round_up(N, n_tile)
    return n_tile, n_pad


def _check_p(p):
    if not (0.0 <= p < 1.0):
        raise ValueError("dropout probability p must be in [0, 1)")


def mc_dropout_forward(x_nchw, weight, bias, *, nb_iter=10, p=0.1, seed=0,
                       activation=None, n_tile_max=512):
    """Stacked MC predictions, shape (B, C_out, H, W, nb_iter) (PyTorch API)."""
    _check_p(p)
    x_cn, w_t, b_col, (B, C_in, H, W, C_out, N) = _prep_inputs(x_nchw, weight, bias)
    n_tile, n_pad = _tiling(N, n_tile_max)
    if n_pad != N:
        x_cn = jnp.pad(x_cn, ((0, 0), (0, n_pad - N)))
    num_n = n_pad // n_tile
    seed_arr = jnp.array([seed], dtype=jnp.int32)

    kernel = functools.partial(_mc_dropout_stack_kernel, p=float(p),
                               activation=activation, n_tile=n_tile,
                               n_total=n_pad)

    preds = pl.pallas_call(
        kernel,
        out_shape=jax.ShapeDtypeStruct((nb_iter, C_out, n_pad), x_nchw.dtype),
        grid_spec=pltpu.PrefetchScalarGridSpec(
            num_scalar_prefetch=1,
            grid=(num_n, nb_iter),
            in_specs=[
                pl.BlockSpec((C_in, n_tile), lambda jn, it, seed: (0, jn)),
                pl.BlockSpec((C_out, C_in), lambda jn, it, seed: (0, 0)),
                pl.BlockSpec((C_out, 1), lambda jn, it, seed: (0, 0)),
            ],
            out_specs=pl.BlockSpec((None, C_out, n_tile),
                                   lambda jn, it, seed: (it, 0, jn)),
        ),
        compiler_params=pltpu.CompilerParams(
            dimension_semantics=("parallel", "parallel"),
            vmem_limit_bytes=32 * 1024 * 1024),
    )(seed_arr, x_cn, w_t, b_col)

    # Kernel-native layout is (nb_iter, C_out, N); the final transpose exists
    # only to match the PyTorch module's (B, C_out, H, W, nb_iter) convention.
    preds = preds[:, :, :N].reshape(nb_iter, C_out, B, H, W)
    preds = jnp.transpose(preds, (2, 1, 3, 4, 0))
    return preds


def mc_dropout_mu_std(x_nchw, weight, bias, *, nb_iter=10, p=0.1, seed=0,
                      activation=None, n_tile_max=512):
    """Fused get_mu_std(): returns (mu, std), each (B, C_out, H, W), without
    ever materializing the (.., nb_iter) prediction stack in HBM."""
    _check_p(p)
    x_cn, w_t, b_col, (B, C_in, H, W, C_out, N) = _prep_inputs(x_nchw, weight, bias)
    n_tile, n_pad = _tiling(N, n_tile_max)
    if n_pad != N:
        x_cn = jnp.pad(x_cn, ((0, 0), (0, n_pad - N)))
    num_n = n_pad // n_tile
    seed_arr = jnp.array([seed], dtype=jnp.int32)

    kernel = functools.partial(_mc_dropout_stats_kernel, p=float(p),
                               activation=activation, n_tile=n_tile,
                               n_total=n_pad, nb_iter=nb_iter)

    mu, std = pl.pallas_call(
        kernel,
        out_shape=(jax.ShapeDtypeStruct((C_out, n_pad), jnp.float32),
                   jax.ShapeDtypeStruct((C_out, n_pad), jnp.float32)),
        grid_spec=pltpu.PrefetchScalarGridSpec(
            num_scalar_prefetch=1,
            grid=(num_n, nb_iter),
            in_specs=[
                pl.BlockSpec((C_in, n_tile), lambda jn, it, seed: (0, jn)),
                pl.BlockSpec((C_out, C_in), lambda jn, it, seed: (0, 0)),
                pl.BlockSpec((C_out, 1), lambda jn, it, seed: (0, 0)),
            ],
            out_specs=[
                pl.BlockSpec((C_out, n_tile), lambda jn, it, seed: (0, jn)),
                pl.BlockSpec((C_out, n_tile), lambda jn, it, seed: (0, jn)),
            ],
        ),
        compiler_params=pltpu.CompilerParams(
            dimension_semantics=("parallel", "arbitrary"),
            vmem_limit_bytes=32 * 1024 * 1024),
    )(seed_arr, x_cn, w_t, b_col)

    def _unflatten(a):
        a = a[:, :N].reshape(C_out, B, H, W)
        return jnp.transpose(a, (1, 0, 2, 3)).astype(x_nchw.dtype)

    return _unflatten(mu), _unflatten(std)


if __name__ == "__main__":
    B, C_in, H, W = 2, 4, 16, 16
    C_out = 8
    nb_iter = 10

    key = jax.random.PRNGKey(0)
    kx, kw, kb = jax.random.split(key, 3)
    x = jax.random.normal(kx, (B, C_in, H, W), dtype=jnp.float32)
    weight = jax.random.normal(kw, (C_in, C_out), dtype=jnp.float32) * 0.1
    bias = jax.random.normal(kb, (C_out,), dtype=jnp.float32) * 0.01

    preds = mc_dropout_forward(x, weight, bias, nb_iter=nb_iter, p=0.1,
                               seed=0, activation=None)
    preds = jax.block_until_ready(preds)
    assert preds.shape == (B, C_out, H, W, nb_iter), preds.shape
    assert bool(jnp.all(jnp.isfinite(preds)))

    mu, std = mc_dropout_mu_std(x, weight, bias, nb_iter=nb_iter, p=0.1,
                                seed=0, activation=None)
    mu, std = jax.block_until_ready((mu, std))
    assert mu.shape == (B, C_out, H, W) and std.shape == (B, C_out, H, W)

    # Fused stats kernel must agree with reducing the stacked predictions
    # (same seed -> identical dropout masks).  Loose std tolerance: the fused
    # E[X^2]-E[X]^2 form differs from the two-pass reference at the f32 ulp
    # level, which sqrt() amplifies near zero variance.
    mu_ref = preds.mean(-1)
    std_ref = preds.std(-1, ddof=1)
    assert bool(jnp.allclose(mu, mu_ref, atol=1e-5, rtol=1e-5))
    assert bool(jnp.allclose(std, std_ref, atol=5e-3, rtol=5e-2))

    print("KERNEL_OK")
</pallas_src>

<mosaic_0001>
module attributes {stable_mosaic.version = 11 : i64} {
  func.func @_mc_dropout_stack_kernel(%arg0: i32, %arg1: i32, %arg2: memref<1xi32, #tpu.memory_space<smem>>, %arg3: memref<4x512xf32, #tpu.memory_space<vmem>>, %arg4: memref<8x4xf32, #tpu.memory_space<vmem>>, %arg5: memref<8x1xf32, #tpu.memory_space<vmem>>, %arg6: memref<1x8x512xf32, #tpu.memory_space<vmem>>) attributes {dimension_semantics = [#tpu.dimension_semantics<parallel>, #tpu.dimension_semantics<parallel>], iteration_bounds = array<i64: 1, 10>, scalar_prefetch = 1 : i64, scratch_operands = 0 : i64, tpu.core_type = #tpu.core_type<tc>, window_params = [{transform_indices = @transform_0, window_bounds = array<i64: 4, 512>}, {pipeline_mode = #tpu.pipeline_mode<synchronous>, transform_indices = @transform_1, window_bounds = array<i64: 8, 4>}, {pipeline_mode = #tpu.pipeline_mode<synchronous>, transform_indices = @transform_2, window_bounds = array<i64: 8, 1>}, {transform_indices = @transform_3, window_bounds = array<i64: 1, 8, 512>}]} {
    %c0 = arith.constant 0 : index
    %0 = memref.load %arg2[%c0] : memref<1xi32, #tpu.memory_space<smem>>
    %c512_i32 = arith.constant 512 : i32
    %1 = arith.muli %arg0, %c512_i32 : i32
    %c0_0 = arith.constant 0 : index
    %c0_1 = arith.constant 0 : index
    %2 = vector.load %arg3[%c0_0, %c0_1] : memref<4x512xf32, #tpu.memory_space<vmem>>, vector<4x512xf32>
    %3 = tpu.iota {dimensions = array<i32: 0>} : vector<4x512xi32>
    %4 = tpu.iota {dimensions = array<i32: 1>} : vector<4x512xi32>
    %c512_i32_2 = arith.constant 512 : i32
    %5 = vector.broadcast %c512_i32_2 : i32 to vector<4x512xi32>
    %6 = arith.muli %3, %5 : vector<4x512xi32>
    %7 = arith.addi %6, %4 : vector<4x512xi32>
    %8 = vector.broadcast %1 : i32 to vector<4x512xi32>
    %9 = arith.addi %7, %8 : vector<4x512xi32>
    %c-1640531527_i32 = arith.constant -1640531527 : i32
    %10 = arith.muli %arg1, %c-1640531527_i32 : i32
    %11 = arith.xori %0, %10 : i32
    %c16_i32 = arith.constant 16 : i32
    %12 = arith.shrui %11, %c16_i32 : i32
    %13 = arith.xori %11, %12 : i32
    %c-2048144789_i32 = arith.constant -2048144789 : i32
    %14 = arith.muli %13, %c-2048144789_i32 : i32
    %c13_i32 = arith.constant 13 : i32
    %15 = arith.shrui %14, %c13_i32 : i32
    %16 = arith.xori %14, %15 : i32
    %c-1028477387_i32 = arith.constant -1028477387 : i32
    %17 = arith.muli %16, %c-1028477387_i32 : i32
    %c16_i32_3 = arith.constant 16 : i32
    %18 = arith.shrui %17, %c16_i32_3 : i32
    %19 = arith.xori %17, %18 : i32
    %c-1640531527_i32_4 = arith.constant -1640531527 : i32
    %20 = vector.broadcast %c-1640531527_i32_4 : i32 to vector<4x512xi32>
    %21 = arith.muli %9, %20 : vector<4x512xi32>
    %22 = vector.broadcast %19 : i32 to vector<4x512xi32>
    %23 = arith.xori %21, %22 : vector<4x512xi32>
    %c16_i32_5 = arith.constant 16 : i32
    %24 = vector.broadcast %c16_i32_5 : i32 to vector<4x512xi32>
    %25 = arith.shrui %23, %24 : vector<4x512xi32>
    %26 = arith.xori %23, %25 : vector<4x512xi32>
    %c-2048144789_i32_6 = arith.constant -2048144789 : i32
    %27 = vector.broadcast %c-2048144789_i32_6 : i32 to vector<4x512xi32>
    %28 = arith.muli %26, %27 : vector<4x512xi32>
    %c13_i32_7 = arith.constant 13 : i32
    %29 = vector.broadcast %c13_i32_7 : i32 to vector<4x512xi32>
    %30 = arith.shrui %28, %29 : vector<4x512xi32>
    %31 = arith.xori %28, %30 : vector<4x512xi32>
    %c-1028477387_i32_8 = arith.constant -1028477387 : i32
    %32 = vector.broadcast %c-1028477387_i32_8 : i32 to vector<4x512xi32>
    %33 = arith.muli %31, %32 : vector<4x512xi32>
    %c16_i32_9 = arith.constant 16 : i32
    %34 = vector.broadcast %c16_i32_9 : i32 to vector<4x512xi32>
    %35 = arith.shrui %33, %34 : vector<4x512xi32>
    %36 = arith.xori %33, %35 : vector<4x512xi32>
    %c429496730_i32 = arith.constant 429496730 : i32
    %37 = vector.broadcast %c429496730_i32 : i32 to vector<4x512xi32>
    %38 = arith.cmpi uge, %36, %37 : vector<4x512xi32>
    %cst = arith.constant 1.11111116 : f32
    %cst_10 = arith.constant 0.000000e+00 : f32
    %39 = vector.broadcast %cst : f32 to vector<4x512xf32>
    %40 = vector.broadcast %cst_10 : f32 to vector<4x512xf32>
    %41 = arith.select %38, %39, %40 : vector<4x512xi1>, vector<4x512xf32>
    %42 = arith.mulf %2, %41 : vector<4x512xf32>
    %c0_11 = arith.constant 0 : index
    %c0_12 = arith.constant 0 : index
    %43 = vector.load %arg4[%c0_11, %c0_12] : memref<8x4xf32, #tpu.memory_space<vmem>>, vector<8x4xf32>
    %44 = vector.extract_strided_slice %43 {offsets = [0, 0], sizes = [8, 1], strides = [1, 1]} : vector<8x4xf32> to vector<8x1xf32>
    %45 = vector.extract_strided_slice %42 {offsets = [0, 0], sizes = [1, 512], strides = [1, 1]} : vector<4x512xf32> to vector<1x512xf32>
    %46 = vector.broadcast %44 : vector<8x1xf32> to vector<8x512xf32>
    %47 = vector.broadcast %45 : vector<1x512xf32> to vector<8x512xf32>
    %48 = arith.mulf %46, %47 : vector<8x512xf32>
    %49 = vector.extract_strided_slice %43 {offsets = [0, 1], sizes = [8, 1], strides = [1, 1]} : vector<8x4xf32> to vector<8x1xf32>
    %50 = vector.extract_strided_slice %42 {offsets = [1, 0], sizes = [1, 512], strides = [1, 1]} : vector<4x512xf32> to vector<1x512xf32>
    %51 = vector.broadcast %49 : vector<8x1xf32> to vector<8x512xf32>
    %52 = vector.broadcast %50 : vector<1x512xf32> to vector<8x512xf32>
    %53 = arith.mulf %51, %52 : vector<8x512xf32>
    %54 = arith.addf %48, %53 : vector<8x512xf32>
    %55 = vector.extract_strided_slice %43 {offsets = [0, 2], sizes = [8, 1], strides = [1, 1]} : vector<8x4xf32> to vector<8x1xf32>
    %56 = vector.extract_strided_slice %42 {offsets = [2, 0], sizes = [1, 512], strides = [1, 1]} : vector<4x512xf32> to vector<1x512xf32>
    %57 = vector.broadcast %55 : vector<8x1xf32> to vector<8x512xf32>
    %58 = vector.broadcast %56 : vector<1x512xf32> to vector<8x512xf32>
    %59 = arith.mulf %57, %58 : vector<8x512xf32>
    %60 = arith.addf %54, %59 : vector<8x512xf32>
    %61 = vector.extract_strided_slice %43 {offsets = [0, 3], sizes = [8, 1], strides = [1, 1]} : vector<8x4xf32> to vector<8x1xf32>
    %62 = vector.extract_strided_slice %42 {offsets = [3, 0], sizes = [1, 512], strides = [1, 1]} : vector<4x512xf32> to vector<1x512xf32>
    %63 = vector.broadcast %61 : vector<8x1xf32> to vector<8x512xf32>
    %64 = vector.broadcast %62 : vector<1x512xf32> to vector<8x512xf32>
    %65 = arith.mulf %63, %64 : vector<8x512xf32>
    %66 = arith.addf %60, %65 : vector<8x512xf32>
    %c0_13 = arith.constant 0 : index
    %c0_14 = arith.constant 0 : index
    %67 = vector.load %arg5[%c0_13, %c0_14] : memref<8x1xf32, #tpu.memory_space<vmem>>, vector<8x1xf32>
    %68 = vector.broadcast %67 : vector<8x1xf32> to vector<8x512xf32>
    %69 = arith.addf %66, %68 : vector<8x512xf32>
    %c0_15 = arith.constant 0 : index
    %c0_16 = arith.constant 0 : index
    %c0_17 = arith.constant 0 : index
    %70 = vector.load %arg6[%c0_15, %c0_16, %c0_17] : memref<1x8x512xf32, #tpu.memory_space<vmem>>, vector<1x8x512xf32>
    %71 = vector.shape_cast %70 : vector<1x8x512xf32> to vector<8x512xf32>
    %72 = vector.shape_cast %69 : vector<8x512xf32> to vector<1x8x512xf32>
    tpu.vector_store %arg6[%c0_15, %c0_16, %c0_17], %72 {strides = array<i32>} : memref<1x8x512xf32, #tpu.memory_space<vmem>>, vector<1x8x512xf32>,
    return
  }
  func.func @transform_0(%arg0: i32, %arg1: i32, %arg2: memref<1xi32, #tpu.memory_space<smem>>) -> (i32, i32) {
    %c0_i32 = arith.constant 0 : i32
    %c0_i32_0 = arith.constant 0 : i32
    return %c0_i32, %arg0 : i32, i32
  }
  func.func @transform_1(%arg0: i32, %arg1: i32, %arg2: memref<1xi32, #tpu.memory_space<smem>>) -> (i32, i32) {
    %c0_i32 = arith.constant 0 : i32
    %c0_i32_0 = arith.constant 0 : i32
    %c0_i32_1 = arith.constant 0 : i32
    return %c0_i32, %c0_i32_0 : i32, i32
  }
  func.func @transform_2(%arg0: i32, %arg1: i32, %arg2: memref<1xi32, #tpu.memory_space<smem>>) -> (i32, i32) {
    %c0_i32 = arith.constant 0 : i32
    %c0_i32_0 = arith.constant 0 : i32
    %c0_i32_1 = arith.constant 0 : i32
    return %c0_i32, %c0_i32_0 : i32, i32
  }
  func.func @transform_3(%arg0: i32, %arg1: i32, %arg2: memref<1xi32, #tpu.memory_space<smem>>) -> (i32, i32, i32) {
    %c0_i32 = arith.constant 0 : i32
    %c0_i32_0 = arith.constant 0 : i32
    return %arg1, %c0_i32, %arg0 : i32, i32, i32
  }
}

</mosaic_0001>

<llo_original>
// kernel: tpu_custom_call.1
$region0: #{tpu_custom_call.1}
  #allocation0 [shape = 'u32[]', space=smem, size = 0x4, offset = 0x4, fixed_abs, tag = 'smem constant byte address 0x4 - core index']
  #allocation1 [shape = 'u32[144,128]{1,0:T(1,128)}', space=vmem, size = 0x12000, scoped, tag = 'internal scratch']
  #allocation2 [shape = 's32[1]{0}', space=sflag, size = 0x4, scoped, tag = 'scoped memory for tpu_custom_call.1']
  #allocation3 [shape = 's32[1]{0:T(128)S(6)}', space=smem, size = 0x200, scoped, tag = 'prefetched SMEM operand 0']
  %s0 = inlined_call_operand.<no memory space> [shape: s32[1], index: 0, kind: input, shape index: {}]
  %s1 = inlined_call_operand.vmem [shape: f32[4,512], index: 1, kind: input, shape index: {}]
  %s2 = inlined_call_operand.vmem [shape: f32[8,4], index: 2, kind: input, shape index: {}]
  %s3 = inlined_call_operand.vmem [shape: f32[8,1], index: 3, kind: input, shape index: {}]
  %s4 = inlined_call_operand.hbm [shape: f32[10,8,512], index: 4, kind: output, shape index: {}]
  %s5 = sld [smem:[#allocation0]]
  $region45: #{tpu_custom_call.1} parent=0
    _
  %s7 = ssub.s32 1, %s5
  %s8 = scalar_select 0, %s7, %s5
  %9 = sst [smem:[#allocation3]] %s0
  $region1: #{tpu_custom_call.1} parent=0
    #allocation4 [shape = 'u8[32768]{0}', space=vmem, size = 0x8000, scoped, tag = 'output window, operand 0']
    #allocation5 [shape = 's32[2]{0}', space=sflag, size = 0x8, scoped, tag = 'scoped memory for tpu_custom_call.1']
    %10 = vsyncpa [#allocation5], 0
    %s11 = scalar_lea.sflag [#allocation5], 1
    %12 = vsyncpa %s11, 0
    loop: start=0, step=1, limit=12
    $region2: #{tpu_custom_call.1} parent=1 // loop_pre_header
      _
    $region3: #{tpu_custom_call.1} parent=1 // loop_header
      %s14 = sphi 0, %s18
      %p15 = scmp.ge.s32.totalorder %s14, 12
      %s21 = sphi 0, %s33
      %s22 = sphi 0, %s29
      %s23 = sphi 0, %s21
      %s24 = sphi 0, %s22
      %s25 = sphi 0, %s23
      %s26 = sphi 0, %s24
      %s36 = sphi 0, %s38
      %s39 = sphi 0, %s36
      %s40 = sphi 0, %s39
      %s56 = sphi 0, %s40
      %s60 = sphi 0, %s60
      %s62 = sphi 0, %s60
      %s63 = sphi 0, %s62
      %s77 = sphi 0, %s63
      %s81 = sphi 0, %s81
      %s83 = sphi 0, %s81
      %s84 = sphi 0, %s83
      %s98 = sphi 0, %s84
      %s106 = sphi 0, %s108
      %s109 = sphi 0, %s106
      %s110 = sphi 0, %s109
      %s126 = sphi 0, %s110
    $region4: #{tpu_custom_call.1} parent=1 // loop_header_branch
      %17 = sbr.rel (%p15) target = $region8
    $region5: #{tpu_custom_call.1} parent=1 // loop_body
      %s19 = ssub.s32 %s14, 1
      %s20 = ssub.s32 %s14, 2
      %s27 = sadd.s32 1, %s22
      %p28 = scmp.ge.s32.totalorder %s27, 10
      %s29 = scalar_select %p28, 0, %s27
      %s30 = sadd.s32 1, %s21
      %s31 = scalar_select %p28, %s30, %s21
      %p32 = scmp.ge.s32.totalorder %s31, 1
      %s33 = scalar_select %p32, 0, %s31
      %s34 = ssub.s32 %s21, %s33
      %p35 = scmp.eq.s32.totalorder %s34, 0
      %s37 = sadd.s32 %s36, 1
      %s38 = scalar_select %p35, %s36, %s37
      %p41 = pneg %p35
      %p42 = scmp.eq.s32.totalorder %s14, 9
      %p43 = por %p41, %p42
      %p44 = scmp.ne.s32.totalorder %s36, %s39
      %p45 = scmp.eq.s32.totalorder %s14, 0
      %p46 = por %p44, %p45
      %p47 = scmp.ne.s32.totalorder %s36, %s39
      %p48 = scmp.eq.s32.totalorder %s19, 9
      %p49 = por %p47, %p48
      %p50 = scmp.ne.s32.totalorder %s39, %s40
      %p51 = scmp.eq.s32.totalorder %s19, 0
      %p52 = por %p50, %p51
      %p53 = scmp.ne.s32.totalorder %s39, %s40
      %p54 = scmp.eq.s32.totalorder %s20, 9
      %p55 = por %p53, %p54
      %p57 = scmp.ne.s32.totalorder %s40, %s56
      %p58 = scmp.eq.s32.totalorder %s20, 0
      %p59 = por %p57, %p58
      %s61 = sadd.s32 %s60, 1
      %p64 = scmp.eq.s32.totalorder %s14, 9
      %p65 = scmp.ne.s32.totalorder %s60, %s62
      %p66 = scmp.eq.s32.totalorder %s14, 0
      %p67 = por %p65, %p66
      %p68 = scmp.ne.s32.totalorder %s60, %s62
      %p69 = scmp.eq.s32.totalorder %s19, 9
      %p70 = por %p68, %p69
      %p71 = scmp.ne.s32.totalorder %s62, %s63
      %p72 = scmp.eq.s32.totalorder %s19, 0
      %p73 = por %p71, %p72
      %p74 = scmp.ne.s32.totalorder %s62, %s63
      %p75 = scmp.eq.s32.totalorder %s20, 9
      %p76 = por %p74, %p75
      %p78 = scmp.ne.s32.totalorder %s63, %s77
      %p79 = scmp.eq.s32.totalorder %s20, 0
      %p80 = por %p78, %p79
      %s82 = sadd.s32 %s81, 1
      %p85 = scmp.eq.s32.totalorder %s14, 9
      %p86 = scmp.ne.s32.totalorder %s81, %s83
      %p87 = scmp.eq.s32.totalorder %s14, 0
      %p88 = por %p86, %p87
      %p89 = scmp.ne.s32.totalorder %s81, %s83
      %p90 = scmp.eq.s32.totalorder %s19, 9
      %p91 = por %p89, %p90
      %p92 = scmp.ne.s32.totalorder %s83, %s84
      %p93 = scmp.eq.s32.totalorder %s19, 0
      %p94 = por %p92, %p93
      %p95 = scmp.ne.s32.totalorder %s83, %s84
      %p96 = scmp.eq.s32.totalorder %s20, 9
      %p97 = por %p95, %p96
      %p99 = scmp.ne.s32.totalorder %s84, %s98
      %p100 = scmp.eq.s32.totalorder %s20, 0
      %p101 = por %p99, %p100
      %s102 = ssub.s32 %s22, %s29
      %s103 = ssub.s32 %s21, %s33
      %s104 = sor.u32 %s102, %s103
      %p105 = scmp.eq.s32.totalorder %s104, 0
      %s107 = sadd.s32 %s106, 1
      %s108 = scalar_select %p105, %s106, %s107
      %p111 = pneg %p105
      %p112 = scmp.eq.s32.totalorder %s14, 9
      %p113 = por %p111, %p112
      %p114 = scmp.ne.s32.totalorder %s106, %s109
      %p115 = scmp.eq.s32.totalorder %s14, 0
      %p116 = por %p114, %p115
      %p117 = scmp.ne.s32.totalorder %s106, %s109
      %p118 = scmp.eq.s32.totalorder %s19, 9
      %p119 = por %p117, %p118
      %p120 = scmp.ne.s32.totalorder %s109, %s110
      %p121 = scmp.eq.s32.totalorder %s19, 0
      %p122 = por %p120, %p121
      %p123 = scmp.ne.s32.totalorder %s109, %s110
      %p124 = scmp.eq.s32.totalorder %s20, 9
      %p125 = por %p123, %p124
      %p127 = scmp.ne.s32.totalorder %s110, %s126
      %p128 = scmp.eq.s32.totalorder %s20, 0
      %p129 = por %p127, %p128
      %p130 = scmp.le.s32.totalorder 1, %s14
      %p131 = scmp.lt.s32.totalorder %s14, 11
      %p132 = pnand %p130, %p131
      %p133 = pneg %p132
      // Predicated region
      $region9: #{tpu_custom_call.1} parent=5 // pred_check
        _
      $region10: #{tpu_custom_call.1} parent=5 // pred_check_branch
        %135 = sbr.rel (%p132) target = $region12
      $region11: #{tpu_custom_call.1} parent=5 // pred_region
        %s136 = ssub.s32 %s14, 1
        // Predicated region
        $region13: #{tpu_custom_call.1} parent=11 // pred_check
          %p137 = pneg %p52
        $region14: #{tpu_custom_call.1} parent=11 // pred_check_branch
          %139 = sbr.rel (%p137) target = $region16
        $region15: #{tpu_custom_call.1} parent=11 // pred_region
          %s140 = smul.u32 4, %s23
          %p141 = scmp.lt.s32.totalorder %s140, 3
          %s142 = scalar_select %p141, %s140, 3
          %s143 = smul.addr %s142, 4
          %s144 = scalar_lea.vmem %s1, %s143
          %s145 = smul.u32 4, %s23
        $region16: #{tpu_custom_call.1} parent=11 // pred_fallthru
          _
        // Predicated region
        $region17: #{tpu_custom_call.1} parent=11 // pred_check
          %p146 = pneg %p73
        $region18: #{tpu_custom_call.1} parent=11 // pred_check_branch
          %148 = sbr.rel (%p146) target = $region20
        $region19: #{tpu_custom_call.1} parent=11 // pred_region
          _
        $region20: #{tpu_custom_call.1} parent=11 // pred_fallthru
          _
        // Predicated region
        $region21: #{tpu_custom_call.1} parent=11 // pred_check
          %p149 = pneg %p94
        $region22: #{tpu_custom_call.1} parent=11 // pred_check_branch
          %151 = sbr.rel (%p149) target = $region24
        $region23: #{tpu_custom_call.1} parent=11 // pred_region
          _
        $region24: #{tpu_custom_call.1} parent=11 // pred_fallthru
          _
      $region12: #{tpu_custom_call.1} parent=5 // pred_fallthru
        _
      %p152 = scmp.lt.s32.totalorder %s14, 10
      // Predicated region
      $region25: #{tpu_custom_call.1} parent=5 // pred_check
        %p153 = pneg %p152
      $region26: #{tpu_custom_call.1} parent=5 // pred_check_branch
        %155 = sbr.rel (%p153) target = $region28
      $region27: #{tpu_custom_call.1} parent=5 // pred_region
        _
      $region28: #{tpu_custom_call.1} parent=5 // pred_fallthru
        _
      %p156 = scmp.le.s32.totalorder 1, %s14
      %p157 = scmp.lt.s32.totalorder %s14, 11
      %p158 = pnand %p156, %p157
      %p159 = pneg %p158
      // Predicated region
      $region29: #{tpu_custom_call.1} parent=5 // pred_check
        _
      $region30: #{tpu_custom_call.1} parent=5 // pred_check_branch
        %161 = sbr.rel (%p158) target = $region32
      $region31: #{tpu_custom_call.1} parent=5 // pred_region
        %s162 = ssub.s32 %s14, 1
        %s163 = smul.u32 4, %s23
        %p164 = scmp.lt.s32.totalorder %s163, 3
        %s165 = scalar_select %p164, %s163, 3
        %s166 = smul.addr %s165, 4
        %s167 = scalar_lea.vmem %s1, %s166
        %p168 = pneg %p52
        %p169 = pneg %p49
        %p170 = pneg %p73
        %p171 = pneg %p70
        %p172 = pneg %p94
        %p173 = pneg %p91
        %p174 = pneg %p122
        %p175 = pneg %p119
        %s176 = sand.u32 %s109, 1
        %s177 = scalar_lea.sflag [#allocation5], %s176
        %s178 = sand.u32 %s109, 1
        %s179 = smul.addr %s178, 32
        %s180 = scalar_lea.vmem [#allocation4], %s179
        %s181 = smul.u32 4, %s23
        %p182 = scmp.lt.s32.totalorder %s181, 3
        %s183 = scalar_select %p182, %s181, 3
        %s184 = smul.addr %s183, 4
        %s185 = scalar_lea.vmem %s1, %s184
        %s186 = smul.u32 4, %s23
        %s187 = smul.u32 4, %s23
        %s188 = sld [smem:[#allocation3]]
        %s189 = smul.u32 %s23, 512
        %v190 = vld [vmem:[%s185] sm:$0xff]
        %v191 = vld [vmem:[%s185 + $0x8] sm:$0xff]
        %v192 = vlaneseq
        %v193 = vshrl.u32 %v192, 7
        %v194 = vlaneseq
        %v195 = vand.u32 %v194, 127
        %v196 = vadd.s32 %v195, 128
        %v197 = vadd.s32 %v195, 256
        %v198 = vadd.s32 %v195, 384
        %v199 = vmul.u32 %v193, 512
        %v200 = vadd.s32 %v199, %v195
        %v201 = vadd.s32 %v199, %v196
        %v202 = vadd.s32 %v199, %v197
        %v203 = vadd.s32 %v199, %v198
        %v204 = vstv %s189
        %v205 = vadd.s32 %v200, %v204
        %v206 = vadd.s32 %v201, %v204
        %v207 = vadd.s32 %v202, %v204
        %v208 = vadd.s32 %v203, %v204
        %s209 = smul.u32 %s24, 2654435769
        %s210 = sxor.u32 %s188, %s209
        %s211 = sshrl.u32 %s210, 16
        %s212 = sxor.u32 %s210, %s211
        %s213 = smul.u32 %s212, 2246822507
        %s214 = sshrl.u32 %s213, 13
        %s215 = sxor.u32 %s213, %s214
        %s216 = smul.u32 %s215, 3266489909
        %s217 = sshrl.u32 %s216, 16
        %s218 = sxor.u32 %s216, %s217
        %v219 = vmul.u32 %v205, 2654435769
        %v220 = vmul.u32 %v206, 2654435769
        %v221 = vmul.u32 %v207, 2654435769
        %v222 = vmul.u32 %v208, 2654435769
        %v223 = vstv %s218
        %v224 = vxor.u32 %v219, %v223
        %v225 = vxor.u32 %v220, %v223
        %v226 = vxor.u32 %v221, %v223
        %v227 = vxor.u32 %v222, %v223
        %v228 = vshrl.u32 %v224, 16
        %v229 = vshrl.u32 %v225, 16
        %v230 = vshrl.u32 %v226, 16
        %v231 = vshrl.u32 %v227, 16
        %v232 = vxor.u32 %v224, %v228
        %v233 = vxor.u32 %v225, %v229
        %v234 = vxor.u32 %v226, %v230
        %v235 = vxor.u32 %v227, %v231
        %v236 = vmul.u32 %v232, 2246822507
        %v237 = vmul.u32 %v233, 2246822507
        %v238 = vmul.u32 %v234, 2246822507
        %v239 = vmul.u32 %v235, 2246822507
        %v240 = vshrl.u32 %v236, 13
        %v241 = vshrl.u32 %v237, 13
        %v242 = vshrl.u32 %v238, 13
        %v243 = vshrl.u32 %v239, 13
        %v244 = vxor.u32 %v236, %v240
        %v245 = vxor.u32 %v237, %v241
        %v246 = vxor.u32 %v238, %v242
        %v247 = vxor.u32 %v239, %v243
        %v248 = vmul.u32 %v244, 3266489909
        %v249 = vmul.u32 %v245, 3266489909
        %v250 = vmul.u32 %v246, 3266489909
        %v251 = vmul.u32 %v247, 3266489909
        %v252 = vshrl.u32 %v248, 16
        %v253 = vshrl.u32 %v249, 16
        %v254 = vshrl.u32 %v250, 16
        %v255 = vshrl.u32 %v251, 16
        %v256 = vxor.u32 %v248, %v252
        %v257 = vxor.u32 %v249, %v253
        %v258 = vxor.u32 %v250, %v254
        %v259 = vxor.u32 %v251, %v255
        %vm260 = vcmp.ge.u32.totalorder %v256, 429496730
        %vm261 = vcmp.ge.u32.totalorder %v257, 429496730
        %vm262 = vcmp.ge.u32.totalorder %v258, 429496730
        %vm263 = vcmp.ge.u32.totalorder %v259, 429496730
        %v264 = vsel %vm260, 1.1111112, 0.0
        %v265 = vsel %vm261, 1.1111112, 0.0
        %v266 = vsel %vm262, 1.1111112, 0.0
        %v267 = vsel %vm263, 1.1111112, 0.0
        %v272 = vcombine.low %v264, %v265
        %v273 = vcombine.low %v266, %v267
        %v276 = vmul.f32 %v190, %v272
        %v277 = vmul.f32 %v191, %v273
        %v278 = vld [vmem:[%s2] sm:$0xff]
        %280 = vset.pattern.permute.xlu0 0
        %281 = vperm.xlu0 %280, %v278
        %v282 = vpop.permute.xlu0 %281
        %v286 = vlaneseq
        %v287 = vshrl.u32 %v286, 7
        %v288 = vsub.s32 0, %v287
        %v289 = vrot.slane %v276, %v288
        %v290 = vlaneseq
        %v291 = vshrl.u32 %v290, 7
        %v292 = vsub.s32 4, %v291
        %v293 = vrot.slane %v276, %v292
        %v294 = vlaneseq
        %v295 = vshrl.u32 %v294, 7
        %v296 = vsub.s32 0, %v295
        %v297 = vrot.slane %v277, %v296
        %v298 = vlaneseq
        %v299 = vshrl.u32 %v298, 7
        %v300 = vsub.s32 4, %v299
        %v301 = vrot.slane %v277, %v300
        %v306 = vlaneseq
        %v307 = vshrl.u32 %v306, 7
        %v308 = vsub.s32 0, %v307
        %v309 = vrot.slane %v289, %v308
        %v310 = vlaneseq
        %v311 = vshrl.u32 %v310, 7
        %v312 = vsub.s32 0, %v311
        %v313 = vrot.slane %v293, %v312
        %v314 = vlaneseq
        %v315 = vshrl.u32 %v314, 7
        %v316 = vsub.s32 0, %v315
        %v317 = vrot.slane %v297, %v316
        %v318 = vlaneseq
        %v319 = vshrl.u32 %v318, 7
        %v320 = vsub.s32 0, %v319
        %v321 = vrot.slane %v301, %v320
        %v322 = vmul.f32 %v282, %v309
        %v323 = vmul.f32 %v282, %v313
        %v324 = vmul.f32 %v282, %v317
        %v325 = vmul.f32 %v282, %v321
        %326 = vset.pattern.permute.xlu0 1
        %327 = vperm.xlu0 %326, %v278
        %v328 = vpop.permute.xlu0 %327
        %v330 = vlaneseq
        %v331 = vshrl.u32 %v330, 7
        %v332 = vsub.s32 1, %v331
        %v333 = vrot.slane %v276, %v332
        %v334 = vlaneseq
        %v335 = vshrl.u32 %v334, 7
        %v336 = vsub.s32 5, %v335
        %v337 = vrot.slane %v276, %v336
        %v338 = vlaneseq
        %v339 = vshrl.u32 %v338, 7
        %v340 = vsub.s32 1, %v339
        %v341 = vrot.slane %v277, %v340
        %v342 = vlaneseq
        %v343 = vshrl.u32 %v342, 7
        %v344 = vsub.s32 5, %v343
        %v345 = vrot.slane %v277, %v344
        %v350 = vlaneseq
        %v351 = vshrl.u32 %v350, 7
        %v352 = vsub.s32 1, %v351
        %v353 = vrot.slane %v333, %v352
        %v354 = vlaneseq
        %v355 = vshrl.u32 %v354, 7
        %v356 = vsub.s32 1, %v355
        %v357 = vrot.slane %v337, %v356
        %v358 = vlaneseq
        %v359 = vshrl.u32 %v358, 7
        %v360 = vsub.s32 1, %v359
        %v361 = vrot.slane %v341, %v360
        %v362 = vlaneseq
        %v363 = vshrl.u32 %v362, 7
        %v364 = vsub.s32 1, %v363
        %v365 = vrot.slane %v345, %v364
        %v366 = vmul.f32 %v328, %v353
        %v367 = vmul.f32 %v328, %v357
        %v368 = vmul.f32 %v328, %v361
        %v369 = vmul.f32 %v328, %v365
        %v370 = vadd.f32 %v322, %v366
        %v371 = vadd.f32 %v323, %v367
        %v372 = vadd.f32 %v324, %v368
        %v373 = vadd.f32 %v325, %v369
        %374 = vset.pattern.permute.xlu0 2
        %375 = vperm.xlu0 %374, %v278
        %v376 = vpop.permute.xlu0 %375
        %v378 = vlaneseq
        %v379 = vshrl.u32 %v378, 7
        %v380 = vsub.s32 2, %v379
        %v381 = vrot.slane %v276, %v380
        %v382 = vlaneseq
        %v383 = vshrl.u32 %v382, 7
        %v384 = vsub.s32 6, %v383
        %v385 = vrot.slane %v276, %v384
        %v386 = vlaneseq
        %v387 = vshrl.u32 %v386, 7
        %v388 = vsub.s32 2, %v387
        %v389 = vrot.slane %v277, %v388
        %v390 = vlaneseq
        %v391 = vshrl.u32 %v390, 7
        %v392 = vsub.s32 6, %v391
        %v393 = vrot.slane %v277, %v392
        %v398 = vlaneseq
        %v399 = vshrl.u32 %v398, 7
        %v400 = vsub.s32 2, %v399
        %v401 = vrot.slane %v381, %v400
        %v402 = vlaneseq
        %v403 = vshrl.u32 %v402, 7
        %v404 = vsub.s32 2, %v403
        %v405 = vrot.slane %v385, %v404
        %v406 = vlaneseq
        %v407 = vshrl.u32 %v406, 7
        %v408 = vsub.s32 2, %v407
        %v409 = vrot.slane %v389, %v408
        %v410 = vlaneseq
        %v411 = vshrl.u32 %v410, 7
        %v412 = vsub.s32 2, %v411
        %v413 = vrot.slane %v393, %v412
        %v414 = vmul.f32 %v376, %v401
        %v415 = vmul.f32 %v376, %v405
        %v416 = vmul.f32 %v376, %v409
        %v417 = vmul.f32 %v376, %v413
        %v418 = vadd.f32 %v370, %v414
        %v419 = vadd.f32 %v371, %v415
        %v420 = vadd.f32 %v372, %v416
        %v421 = vadd.f32 %v373, %v417
        %422 = vset.pattern.permute.xlu0 3
        %423 = vperm.xlu0 %422, %v278
        %v424 = vpop.permute.xlu0 %423
        %v426 = vlaneseq
        %v427 = vshrl.u32 %v426, 7
        %v428 = vsub.s32 3, %v427
        %v429 = vrot.slane %v276, %v428
        %v430 = vlaneseq
        %v431 = vshrl.u32 %v430, 7
        %v432 = vsub.s32 7, %v431
        %v433 = vrot.slane %v276, %v432
        %v434 = vlaneseq
        %v435 = vshrl.u32 %v434, 7
        %v436 = vsub.s32 3, %v435
        %v437 = vrot.slane %v277, %v436
        %v438 = vlaneseq
        %v439 = vshrl.u32 %v438, 7
        %v440 = vsub.s32 7, %v439
        %v441 = vrot.slane %v277, %v440
        %v446 = vlaneseq
        %v447 = vshrl.u32 %v446, 7
        %v448 = vsub.s32 3, %v447
        %v449 = vrot.slane %v429, %v448
        %v450 = vlaneseq
        %v451 = vshrl.u32 %v450, 7
        %v452 = vsub.s32 3, %v451
        %v453 = vrot.slane %v433, %v452
        %v454 = vlaneseq
        %v455 = vshrl.u32 %v454, 7
        %v456 = vsub.s32 3, %v455
        %v457 = vrot.slane %v437, %v456
        %v458 = vlaneseq
        %v459 = vshrl.u32 %v458, 7
        %v460 = vsub.s32 3, %v459
        %v461 = vrot.slane %v441, %v460
        %v462 = vmul.f32 %v424, %v449
        %v463 = vmul.f32 %v424, %v453
        %v464 = vmul.f32 %v424, %v457
        %v465 = vmul.f32 %v424, %v461
        %v466 = vadd.f32 %v418, %v462
        %v467 = vadd.f32 %v419, %v463
        %v468 = vadd.f32 %v420, %v464
        %v469 = vadd.f32 %v421, %v465
        %v470 = vld [vmem:[%s3] sm:$0xff]
        %472 = vset.pattern.permute.xlu0 0
        %473 = vperm.xlu0 %472, %v470
        %v474 = vpop.permute.xlu0 %473
        %v476 = vadd.f32 %v466, %v474
        %v477 = vadd.f32 %v467, %v474
        %v478 = vadd.f32 %v468, %v474
        %v479 = vadd.f32 %v469, %v474
        %480 = vst [vmem:[%s180] sm:$0xff] %v476
        %481 = vst [vmem:[%s180 + $0x8] sm:$0xff] %v477
        %482 = vst [vmem:[%s180 + $0x10] sm:$0xff] %v478
        %483 = vst [vmem:[%s180 + $0x18] sm:$0xff] %v479
        %s484 = sand.u32 %s109, 1
        %s485 = scalar_lea.sflag [#allocation5], %s484
        %s486 = sand.u32 %s109, 1
        %s487 = smul.addr %s486, 32
        %s488 = scalar_lea.vmem [#allocation4], %s487
        // Predicated region
        $region33: #{tpu_custom_call.1} parent=31 // pred_check
          %p489 = pneg %p119
        $region34: #{tpu_custom_call.1} parent=31 // pred_check_branch
          %491 = sbr.rel (%p489) target = $region36
        $region35: #{tpu_custom_call.1} parent=31 // pred_region
          %s492 = smul.u32 4, %s23
          %s494 = ssub.s32 512, 512
          %495 = vsyncadd %s485, %s494
          %s496 = smul.addr %s24, 4
          %s497 = sadd.s32 %s492, %s496
          %s498 = smul.addr %s497, 128
          %s499 = scalar_lea.hbm %s4, %s498
          %s501 = sshll.u32 %s488, 4
          %s502 = int_to_ptr.vmem [resolvable:$true] %s501
          %504 = dma.vmem_to_hbm [thread:$0]  %s502, 512, %s499, %s485
        $region36: #{tpu_custom_call.1} parent=31 // pred_fallthru
          _
      $region32: #{tpu_custom_call.1} parent=5 // pred_fallthru
        _
      %p505 = scmp.le.s32.totalorder 2, %s14
      // Predicated region
      $region37: #{tpu_custom_call.1} parent=5 // pred_check
        %p506 = pneg %p505
      $region38: #{tpu_custom_call.1} parent=5 // pred_check_branch
        %508 = sbr.rel (%p506) target = $region40
      $region39: #{tpu_custom_call.1} parent=5 // pred_region
        %s509 = ssub.s32 %s14, 2
        // Predicated region
        $region41: #{tpu_custom_call.1} parent=39 // pred_check
          %p510 = pneg %p125
        $region42: #{tpu_custom_call.1} parent=39 // pred_check_branch
          %512 = sbr.rel (%p510) target = $region44
        $region43: #{tpu_custom_call.1} parent=39 // pred_region
          %s513 = sand.u32 %s110, 1
          %s514 = scalar_lea.sflag [#allocation5], %s513
          %s515 = sand.u32 %s110, 1
          %s516 = smul.addr %s515, 32
          %s517 = scalar_lea.vmem [#allocation4], %s516
          %518 = dma.done %s514, 512
        $region44: #{tpu_custom_call.1} parent=39 // pred_fallthru
          _
      $region40: #{tpu_custom_call.1} parent=5 // pred_fallthru
        _
    $region6: #{tpu_custom_call.1} parent=1 // loop_footer
      %s18 = sadd.s32 1, %s14
    $region7: #{tpu_custom_call.1} parent=1 // loop_footer_branch
      %13 = sbr.rel target = $region3
    $region8: #{tpu_custom_call.1} parent=1 // loop_exit
      _
    %519 = vsyncpa [#allocation5], 1
    %s520 = scalar_lea.sflag [#allocation5], 1
    %521 = vsyncpa %s520, 1

</llo_original>
